<compile_context>
chip_gen: v5e
topology: v5e:2x2
jax: 0.10.0
libtpu: 0.0.40
codegen_flags: <defaults>
</compile_context>

<pallas_src>
import jax
import jax.numpy as jnp
from jax import lax
from jax.experimental import pallas as pl
from jax.experimental.pallas import tpu as pltpu

LANE = 128
CHUNK_ROWS = 64  # rows per register-resident inner chunk (8 vregs of x in f32)


def _round_up(x, m):
    return ((x + m - 1) // m) * m


def _make_kernel(H, block_rows, chunk_rows, compute_dtype):
    """out = b2 + sum_h w2[h] * tanh(w1[h]*x + b1[h]), x lane-dense (rows,128)."""
    assert block_rows % chunk_rows == 0
    n_chunks = block_rows // chunk_rows
    H2 = H // 2
    use_lowp = compute_dtype != jnp.float32

    def kernel(w1_ref, b1_ref, w2_ref, b2_ref, x_ref, o_ref):
        # w1/b1/w2: (H,) f32 SMEM; b2: (1,) f32 SMEM.
        # x_ref / o_ref: (block_rows, 128) VMEM tiles.

        def branch(x, xc, h):
            # tanh(w1[h]*x + b1[h]) in compute_dtype, scaled + accumulated in f32.
            if use_lowp:
                z = (w1_ref[h].astype(compute_dtype) * xc
                     + b1_ref[h].astype(compute_dtype))
                t = jnp.tanh(z).astype(jnp.float32)
            else:
                t = jnp.tanh(w1_ref[h] * x + b1_ref[h])
            return w2_ref[h] * t

        def chunk_body(c, carry):
            r = pl.multiple_of(c * chunk_rows, chunk_rows)
            x = x_ref[pl.ds(r, chunk_rows), :].astype(jnp.float32)
            xc = x.astype(compute_dtype) if use_lowp else x

            def h_body(i, accs):
                a0, a1 = accs
                h0 = 2 * i
                a0 = a0 + branch(x, xc, h0)
                a1 = a1 + branch(x, xc, h0 + 1)
                return a0, a1

            # Two independent accumulators keep the single EUP slot busy;
            # b2 is folded into the init so no extra full-tile add at the end.
            init = (jnp.full_like(x, b2_ref[0]), jnp.zeros_like(x))
            a0, a1 = lax.fori_loop(0, H2, h_body, init, unroll=True)
            acc = a0 + a1
            if H % 2 == 1:  # static tail for odd H
                acc = acc + branch(x, xc, H - 1)
            o_ref[pl.ds(r, chunk_rows), :] = acc.astype(o_ref.dtype)
            return carry

        # Non-unrolled loop over chunks bounds live ranges (keeps vreg pressure
        # at x(8) + 2*acc(16) + temps, well inside the 64-vreg file).
        lax.fori_loop(0, n_chunks, chunk_body, 0, unroll=False)

    return kernel


def transforma1d_forward(x, w1, b1, w2, b2, *, max_block_rows=512,
                         compute_dtype=jnp.float32):
    """x: (B, N) float32.  w1:(H,1) b1:(H,) w2:(1,H) b2:(1,) (PyTorch shapes)."""
    B, N = x.shape
    H = w1.shape[0]
    total = B * N

    # Lane-dense slab: flatten to (rows, 128); pad rows only to a multiple of 8
    # (sublane granularity). Pallas masks the partial final grid block, so no
    # padding to block multiples and no big wrapper-side HBM copies.
    rows = pl.cdiv(total, LANE)
    rows_padded = _round_up(rows, 8)
    pad = rows_padded * LANE - total

    # Block size: biggest tile <= max_block_rows, but aim for >= 2 grid steps
    # so both v7x TensorCores get work along the "parallel" axis.
    target = max(8, min(max_block_rows, _round_up(pl.cdiv(rows_padded, 2), 8)))
    if target >= CHUNK_ROWS:
        block_rows = min(_round_up(target, CHUNK_ROWS), max_block_rows)
        chunk_rows = CHUNK_ROWS
    else:
        block_rows = target
        chunk_rows = target
    grid = (pl.cdiv(rows_padded, block_rows),)

    x_flat = x.reshape(-1)
    if pad:
        x_flat = jnp.pad(x_flat, (0, pad))
    x2d = x_flat.reshape(rows_padded, LANE)

    # Tiny parameters (2H+2 floats) as flat f32 vectors for SMEM scalar reads.
    w1f = w1.reshape(H).astype(jnp.float32)   # Linear(1,H).weight
    b1f = b1.reshape(H).astype(jnp.float32)   # Linear(1,H).bias
    w2f = w2.reshape(H).astype(jnp.float32)   # Linear(H,1).weight
    b2f = b2.reshape(1).astype(jnp.float32)   # Linear(H,1).bias

    smem_spec = pl.BlockSpec(memory_space=pltpu.MemorySpace.SMEM)

    out2d = pl.pallas_call(
        _make_kernel(H, block_rows, chunk_rows, compute_dtype),
        out_shape=jax.ShapeDtypeStruct((rows_padded, LANE), x.dtype),
        grid=grid,
        in_specs=[
            smem_spec,  # w1
            smem_spec,  # b1
            smem_spec,  # w2
            smem_spec,  # b2
            pl.BlockSpec((block_rows, LANE), lambda i: (i, 0)),  # x tiles
        ],
        out_specs=pl.BlockSpec((block_rows, LANE), lambda i: (i, 0)),
        compiler_params=pltpu.CompilerParams(
            dimension_semantics=("parallel",)),
        cost_estimate=pl.CostEstimate(
            flops=5 * H * total,
            transcendentals=H * total,
            bytes_accessed=8 * total),
    )(w1f, b1f, w2f, b2f, x2d)

    out_flat = out2d.reshape(-1)
    if pad:
        out_flat = out_flat[:total]
    return out_flat.reshape(B, N)


def _reference(x, w1, b1, w2, b2):
    # Pure-JAX reference mirroring the PyTorch loop (all branches share weights).
    B, N = x.shape
    cols = []
    for e in range(N):
        xe = x[:, e:e + 1]                                  # (B, 1)
        h = jnp.tanh(xe @ w1.T + b1[None, :])               # (B, H)
        cols.append(h @ w2.T + b2[None, :])                 # (B, 1)
    return jnp.concatenate(cols, axis=1)


if __name__ == "__main__":
    numentradas = 4   # N
    numinter = 32     # H
    batch = 8         # B

    key = jax.random.PRNGKey(0)
    kx, k1, k2, k3, k4, kx2 = jax.random.split(key, 6)

    # Deterministic parameter init (shapes match nn.Linear(1,H) / nn.Linear(H,1)).
    w1 = jax.random.uniform(k1, (numinter, 1), jnp.float32, -1.0, 1.0)      # Linear(1,H).weight
    b1 = jax.random.uniform(k2, (numinter,),   jnp.float32, -1.0, 1.0)      # Linear(1,H).bias
    bound = 1.0 / (numinter ** 0.5)
    w2 = jax.random.uniform(k3, (1, numinter), jnp.float32, -bound, bound)  # Linear(H,1).weight
    b2 = jax.random.uniform(k4, (1,),          jnp.float32, -bound, bound)  # Linear(H,1).bias

    # Primary small case matching the module defaults.
    x = jax.random.normal(kx, (batch, numentradas), jnp.float32)
    out = jax.block_until_ready(transforma1d_forward(x, w1, b1, w2, b2))
    ref = _reference(x, w1, b1, w2, b2)
    assert out.shape == (batch, numentradas)
    assert jnp.allclose(out, ref, atol=1e-5, rtol=1e-5)

    # Secondary case exercising the multi-chunk inner loop, a 2-step parallel
    # grid and a masked partial final block.
    x2 = jax.random.normal(kx2, (128, 130), jnp.float32)
    out2 = jax.block_until_ready(transforma1d_forward(x2, w1, b1, w2, b2))
    ref2 = _reference(x2, w1, b1, w2, b2)
    assert out2.shape == (128, 130)
    assert jnp.allclose(out2, ref2, atol=1e-5, rtol=1e-5)

    print("KERNEL_OK")
</pallas_src>

<mosaic_0001>
module attributes {stable_mosaic.version = 11 : i64} {
  func.func @kernel(%arg0: i32, %arg1: memref<32xf32, #tpu.memory_space<smem>>, %arg2: memref<32xf32, #tpu.memory_space<smem>>, %arg3: memref<32xf32, #tpu.memory_space<smem>>, %arg4: memref<1xf32, #tpu.memory_space<smem>>, %arg5: memref<8x128xf32, #tpu.memory_space<vmem>>, %arg6: memref<8x128xf32, #tpu.memory_space<vmem>>) attributes {dimension_semantics = [#tpu.dimension_semantics<parallel>], iteration_bounds = array<i64: 1>, scalar_prefetch = 0 : i64, scratch_operands = 0 : i64, tpu.core_type = #tpu.core_type<tc>, window_params = [{transform_indices = @transform_0, window_bounds = array<i64: 32>}, {transform_indices = @transform_1, window_bounds = array<i64: 32>}, {transform_indices = @transform_2, window_bounds = array<i64: 32>}, {transform_indices = @transform_3, window_bounds = array<i64: 1>}, {transform_indices = @transform_4, window_bounds = array<i64: 8, 128>}, {transform_indices = @transform_5, window_bounds = array<i64: 8, 128>}]} {
    %c0_i32 = arith.constant 0 : i32
    %c8_i32 = arith.constant 8 : i32
    %0 = arith.muli %c0_i32, %c8_i32 : i32
    %1 = tpu.assume_multiple %0, 8 : i32
    %2 = arith.index_cast %1 : i32 to index
    %c0 = arith.constant 0 : index
    %3 = vector.load %arg5[%2, %c0] : memref<8x128xf32, #tpu.memory_space<vmem>>, vector<8x128xf32>
    %c0_0 = arith.constant 0 : index
    %4 = memref.load %arg4[%c0_0] : memref<1xf32, #tpu.memory_space<smem>>
    %5 = vector.broadcast %4 : f32 to vector<8x128xf32>
    %cst = arith.constant 0.000000e+00 : f32
    %6 = vector.broadcast %cst : f32 to vector<8x128xf32>
    %c0_i32_1 = arith.constant 0 : i32
    %c2_i32 = arith.constant 2 : i32
    %7 = arith.muli %c2_i32, %c0_i32_1 : i32
    %8 = arith.index_cast %7 : i32 to index
    %9 = memref.load %arg1[%8] : memref<32xf32, #tpu.memory_space<smem>>
    %10 = vector.broadcast %9 : f32 to vector<8x128xf32>
    %11 = arith.mulf %10, %3 : vector<8x128xf32>
    %12 = arith.index_cast %7 : i32 to index
    %13 = memref.load %arg2[%12] : memref<32xf32, #tpu.memory_space<smem>>
    %14 = vector.broadcast %13 : f32 to vector<8x128xf32>
    %15 = arith.addf %11, %14 : vector<8x128xf32>
    %16 = math.tanh %15 : vector<8x128xf32>
    %17 = arith.index_cast %7 : i32 to index
    %18 = memref.load %arg3[%17] : memref<32xf32, #tpu.memory_space<smem>>
    %19 = vector.broadcast %18 : f32 to vector<8x128xf32>
    %20 = arith.mulf %19, %16 : vector<8x128xf32>
    %21 = arith.addf %5, %20 : vector<8x128xf32>
    %c1_i32 = arith.constant 1 : i32
    %22 = arith.addi %7, %c1_i32 : i32
    %23 = arith.index_cast %22 : i32 to index
    %24 = memref.load %arg1[%23] : memref<32xf32, #tpu.memory_space<smem>>
    %25 = vector.broadcast %24 : f32 to vector<8x128xf32>
    %26 = arith.mulf %25, %3 : vector<8x128xf32>
    %27 = arith.index_cast %22 : i32 to index
    %28 = memref.load %arg2[%27] : memref<32xf32, #tpu.memory_space<smem>>
    %29 = vector.broadcast %28 : f32 to vector<8x128xf32>
    %30 = arith.addf %26, %29 : vector<8x128xf32>
    %31 = math.tanh %30 : vector<8x128xf32>
    %32 = arith.index_cast %22 : i32 to index
    %33 = memref.load %arg3[%32] : memref<32xf32, #tpu.memory_space<smem>>
    %34 = vector.broadcast %33 : f32 to vector<8x128xf32>
    %35 = arith.mulf %34, %31 : vector<8x128xf32>
    %36 = arith.addf %6, %35 : vector<8x128xf32>
    %c1_i32_2 = arith.constant 1 : i32
    %c2_i32_3 = arith.constant 2 : i32
    %37 = arith.muli %c2_i32_3, %c1_i32_2 : i32
    %38 = arith.index_cast %37 : i32 to index
    %39 = memref.load %arg1[%38] : memref<32xf32, #tpu.memory_space<smem>>
    %40 = vector.broadcast %39 : f32 to vector<8x128xf32>
    %41 = arith.mulf %40, %3 : vector<8x128xf32>
    %42 = arith.index_cast %37 : i32 to index
    %43 = memref.load %arg2[%42] : memref<32xf32, #tpu.memory_space<smem>>
    %44 = vector.broadcast %43 : f32 to vector<8x128xf32>
    %45 = arith.addf %41, %44 : vector<8x128xf32>
    %46 = math.tanh %45 : vector<8x128xf32>
    %47 = arith.index_cast %37 : i32 to index
    %48 = memref.load %arg3[%47] : memref<32xf32, #tpu.memory_space<smem>>
    %49 = vector.broadcast %48 : f32 to vector<8x128xf32>
    %50 = arith.mulf %49, %46 : vector<8x128xf32>
    %51 = arith.addf %21, %50 : vector<8x128xf32>
    %c1_i32_4 = arith.constant 1 : i32
    %52 = arith.addi %37, %c1_i32_4 : i32
    %53 = arith.index_cast %52 : i32 to index
    %54 = memref.load %arg1[%53] : memref<32xf32, #tpu.memory_space<smem>>
    %55 = vector.broadcast %54 : f32 to vector<8x128xf32>
    %56 = arith.mulf %55, %3 : vector<8x128xf32>
    %57 = arith.index_cast %52 : i32 to index
    %58 = memref.load %arg2[%57] : memref<32xf32, #tpu.memory_space<smem>>
    %59 = vector.broadcast %58 : f32 to vector<8x128xf32>
    %60 = arith.addf %56, %59 : vector<8x128xf32>
    %61 = math.tanh %60 : vector<8x128xf32>
    %62 = arith.index_cast %52 : i32 to index
    %63 = memref.load %arg3[%62] : memref<32xf32, #tpu.memory_space<smem>>
    %64 = vector.broadcast %63 : f32 to vector<8x128xf32>
    %65 = arith.mulf %64, %61 : vector<8x128xf32>
    %66 = arith.addf %36, %65 : vector<8x128xf32>
    %c2_i32_5 = arith.constant 2 : i32
    %c2_i32_6 = arith.constant 2 : i32
    %67 = arith.muli %c2_i32_6, %c2_i32_5 : i32
    %68 = arith.index_cast %67 : i32 to index
    %69 = memref.load %arg1[%68] : memref<32xf32, #tpu.memory_space<smem>>
    %70 = vector.broadcast %69 : f32 to vector<8x128xf32>
    %71 = arith.mulf %70, %3 : vector<8x128xf32>
    %72 = arith.index_cast %67 : i32 to index
    %73 = memref.load %arg2[%72] : memref<32xf32, #tpu.memory_space<smem>>
    %74 = vector.broadcast %73 : f32 to vector<8x128xf32>
    %75 = arith.addf %71, %74 : vector<8x128xf32>
    %76 = math.tanh %75 : vector<8x128xf32>
    %77 = arith.index_cast %67 : i32 to index
    %78 = memref.load %arg3[%77] : memref<32xf32, #tpu.memory_space<smem>>
    %79 = vector.broadcast %78 : f32 to vector<8x128xf32>
    %80 = arith.mulf %79, %76 : vector<8x128xf32>
    %81 = arith.addf %51, %80 : vector<8x128xf32>
    %c1_i32_7 = arith.constant 1 : i32
    %82 = arith.addi %67, %c1_i32_7 : i32
    %83 = arith.index_cast %82 : i32 to index
    %84 = memref.load %arg1[%83] : memref<32xf32, #tpu.memory_space<smem>>
    %85 = vector.broadcast %84 : f32 to vector<8x128xf32>
    %86 = arith.mulf %85, %3 : vector<8x128xf32>
    %87 = arith.index_cast %82 : i32 to index
    %88 = memref.load %arg2[%87] : memref<32xf32, #tpu.memory_space<smem>>
    %89 = vector.broadcast %88 : f32 to vector<8x128xf32>
    %90 = arith.addf %86, %89 : vector<8x128xf32>
    %91 = math.tanh %90 : vector<8x128xf32>
    %92 = arith.index_cast %82 : i32 to index
    %93 = memref.load %arg3[%92] : memref<32xf32, #tpu.memory_space<smem>>
    %94 = vector.broadcast %93 : f32 to vector<8x128xf32>
    %95 = arith.mulf %94, %91 : vector<8x128xf32>
    %96 = arith.addf %66, %95 : vector<8x128xf32>
    %c3_i32 = arith.constant 3 : i32
    %c2_i32_8 = arith.constant 2 : i32
    %97 = arith.muli %c2_i32_8, %c3_i32 : i32
    %98 = arith.index_cast %97 : i32 to index
    %99 = memref.load %arg1[%98] : memref<32xf32, #tpu.memory_space<smem>>
    %100 = vector.broadcast %99 : f32 to vector<8x128xf32>
    %101 = arith.mulf %100, %3 : vector<8x128xf32>
    %102 = arith.index_cast %97 : i32 to index
    %103 = memref.load %arg2[%102] : memref<32xf32, #tpu.memory_space<smem>>
    %104 = vector.broadcast %103 : f32 to vector<8x128xf32>
    %105 = arith.addf %101, %104 : vector<8x128xf32>
    %106 = math.tanh %105 : vector<8x128xf32>
    %107 = arith.index_cast %97 : i32 to index
    %108 = memref.load %arg3[%107] : memref<32xf32, #tpu.memory_space<smem>>
    %109 = vector.broadcast %108 : f32 to vector<8x128xf32>
    %110 = arith.mulf %109, %106 : vector<8x128xf32>
    %111 = arith.addf %81, %110 : vector<8x128xf32>
    %c1_i32_9 = arith.constant 1 : i32
    %112 = arith.addi %97, %c1_i32_9 : i32
    %113 = arith.index_cast %112 : i32 to index
    %114 = memref.load %arg1[%113] : memref<32xf32, #tpu.memory_space<smem>>
    %115 = vector.broadcast %114 : f32 to vector<8x128xf32>
    %116 = arith.mulf %115, %3 : vector<8x128xf32>
    %117 = arith.index_cast %112 : i32 to index
    %118 = memref.load %arg2[%117] : memref<32xf32, #tpu.memory_space<smem>>
    %119 = vector.broadcast %118 : f32 to vector<8x128xf32>
    %120 = arith.addf %116, %119 : vector<8x128xf32>
    %121 = math.tanh %120 : vector<8x128xf32>
    %122 = arith.index_cast %112 : i32 to index
    %123 = memref.load %arg3[%122] : memref<32xf32, #tpu.memory_space<smem>>
    %124 = vector.broadcast %123 : f32 to vector<8x128xf32>
    %125 = arith.mulf %124, %121 : vector<8x128xf32>
    %126 = arith.addf %96, %125 : vector<8x128xf32>
    %c4_i32 = arith.constant 4 : i32
    %c2_i32_10 = arith.constant 2 : i32
    %127 = arith.muli %c2_i32_10, %c4_i32 : i32
    %128 = arith.index_cast %127 : i32 to index
    %129 = memref.load %arg1[%128] : memref<32xf32, #tpu.memory_space<smem>>
    %130 = vector.broadcast %129 : f32 to vector<8x128xf32>
    %131 = arith.mulf %130, %3 : vector<8x128xf32>
    %132 = arith.index_cast %127 : i32 to index
    %133 = memref.load %arg2[%132] : memref<32xf32, #tpu.memory_space<smem>>
    %134 = vector.broadcast %133 : f32 to vector<8x128xf32>
    %135 = arith.addf %131, %134 : vector<8x128xf32>
    %136 = math.tanh %135 : vector<8x128xf32>
    %137 = arith.index_cast %127 : i32 to index
    %138 = memref.load %arg3[%137] : memref<32xf32, #tpu.memory_space<smem>>
    %139 = vector.broadcast %138 : f32 to vector<8x128xf32>
    %140 = arith.mulf %139, %136 : vector<8x128xf32>
    %141 = arith.addf %111, %140 : vector<8x128xf32>
    %c1_i32_11 = arith.constant 1 : i32
    %142 = arith.addi %127, %c1_i32_11 : i32
    %143 = arith.index_cast %142 : i32 to index
    %144 = memref.load %arg1[%143] : memref<32xf32, #tpu.memory_space<smem>>
    %145 = vector.broadcast %144 : f32 to vector<8x128xf32>
    %146 = arith.mulf %145, %3 : vector<8x128xf32>
    %147 = arith.index_cast %142 : i32 to index
    %148 = memref.load %arg2[%147] : memref<32xf32, #tpu.memory_space<smem>>
    %149 = vector.broadcast %148 : f32 to vector<8x128xf32>
    %150 = arith.addf %146, %149 : vector<8x128xf32>
    %151 = math.tanh %150 : vector<8x128xf32>
    %152 = arith.index_cast %142 : i32 to index
    %153 = memref.load %arg3[%152] : memref<32xf32, #tpu.memory_space<smem>>
    %154 = vector.broadcast %153 : f32 to vector<8x128xf32>
    %155 = arith.mulf %154, %151 : vector<8x128xf32>
    %156 = arith.addf %126, %155 : vector<8x128xf32>
    %c5_i32 = arith.constant 5 : i32
    %c2_i32_12 = arith.constant 2 : i32
    %157 = arith.muli %c2_i32_12, %c5_i32 : i32
    %158 = arith.index_cast %157 : i32 to index
    %159 = memref.load %arg1[%158] : memref<32xf32, #tpu.memory_space<smem>>
    %160 = vector.broadcast %159 : f32 to vector<8x128xf32>
    %161 = arith.mulf %160, %3 : vector<8x128xf32>
    %162 = arith.index_cast %157 : i32 to index
    %163 = memref.load %arg2[%162] : memref<32xf32, #tpu.memory_space<smem>>
    %164 = vector.broadcast %163 : f32 to vector<8x128xf32>
    %165 = arith.addf %161, %164 : vector<8x128xf32>
    %166 = math.tanh %165 : vector<8x128xf32>
    %167 = arith.index_cast %157 : i32 to index
    %168 = memref.load %arg3[%167] : memref<32xf32, #tpu.memory_space<smem>>
    %169 = vector.broadcast %168 : f32 to vector<8x128xf32>
    %170 = arith.mulf %169, %166 : vector<8x128xf32>
    %171 = arith.addf %141, %170 : vector<8x128xf32>
    %c1_i32_13 = arith.constant 1 : i32
    %172 = arith.addi %157, %c1_i32_13 : i32
    %173 = arith.index_cast %172 : i32 to index
    %174 = memref.load %arg1[%173] : memref<32xf32, #tpu.memory_space<smem>>
    %175 = vector.broadcast %174 : f32 to vector<8x128xf32>
    %176 = arith.mulf %175, %3 : vector<8x128xf32>
    %177 = arith.index_cast %172 : i32 to index
    %178 = memref.load %arg2[%177] : memref<32xf32, #tpu.memory_space<smem>>
    %179 = vector.broadcast %178 : f32 to vector<8x128xf32>
    %180 = arith.addf %176, %179 : vector<8x128xf32>
    %181 = math.tanh %180 : vector<8x128xf32>
    %182 = arith.index_cast %172 : i32 to index
    %183 = memref.load %arg3[%182] : memref<32xf32, #tpu.memory_space<smem>>
    %184 = vector.broadcast %183 : f32 to vector<8x128xf32>
    %185 = arith.mulf %184, %181 : vector<8x128xf32>
    %186 = arith.addf %156, %185 : vector<8x128xf32>
    %c6_i32 = arith.constant 6 : i32
    %c2_i32_14 = arith.constant 2 : i32
    %187 = arith.muli %c2_i32_14, %c6_i32 : i32
    %188 = arith.index_cast %187 : i32 to index
    %189 = memref.load %arg1[%188] : memref<32xf32, #tpu.memory_space<smem>>
    %190 = vector.broadcast %189 : f32 to vector<8x128xf32>
    %191 = arith.mulf %190, %3 : vector<8x128xf32>
    %192 = arith.index_cast %187 : i32 to index
    %193 = memref.load %arg2[%192] : memref<32xf32, #tpu.memory_space<smem>>
    %194 = vector.broadcast %193 : f32 to vector<8x128xf32>
    %195 = arith.addf %191, %194 : vector<8x128xf32>
    %196 = math.tanh %195 : vector<8x128xf32>
    %197 = arith.index_cast %187 : i32 to index
    %198 = memref.load %arg3[%197] : memref<32xf32, #tpu.memory_space<smem>>
    %199 = vector.broadcast %198 : f32 to vector<8x128xf32>
    %200 = arith.mulf %199, %196 : vector<8x128xf32>
    %201 = arith.addf %171, %200 : vector<8x128xf32>
    %c1_i32_15 = arith.constant 1 : i32
    %202 = arith.addi %187, %c1_i32_15 : i32
    %203 = arith.index_cast %202 : i32 to index
    %204 = memref.load %arg1[%203] : memref<32xf32, #tpu.memory_space<smem>>
    %205 = vector.broadcast %204 : f32 to vector<8x128xf32>
    %206 = arith.mulf %205, %3 : vector<8x128xf32>
    %207 = arith.index_cast %202 : i32 to index
    %208 = memref.load %arg2[%207] : memref<32xf32, #tpu.memory_space<smem>>
    %209 = vector.broadcast %208 : f32 to vector<8x128xf32>
    %210 = arith.addf %206, %209 : vector<8x128xf32>
    %211 = math.tanh %210 : vector<8x128xf32>
    %212 = arith.index_cast %202 : i32 to index
    %213 = memref.load %arg3[%212] : memref<32xf32, #tpu.memory_space<smem>>
    %214 = vector.broadcast %213 : f32 to vector<8x128xf32>
    %215 = arith.mulf %214, %211 : vector<8x128xf32>
    %216 = arith.addf %186, %215 : vector<8x128xf32>
    %c7_i32 = arith.constant 7 : i32
    %c2_i32_16 = arith.constant 2 : i32
    %217 = arith.muli %c2_i32_16, %c7_i32 : i32
    %218 = arith.index_cast %217 : i32 to index
    %219 = memref.load %arg1[%218] : memref<32xf32, #tpu.memory_space<smem>>
    %220 = vector.broadcast %219 : f32 to vector<8x128xf32>
    %221 = arith.mulf %220, %3 : vector<8x128xf32>
    %222 = arith.index_cast %217 : i32 to index
    %223 = memref.load %arg2[%222] : memref<32xf32, #tpu.memory_space<smem>>
    %224 = vector.broadcast %223 : f32 to vector<8x128xf32>
    %225 = arith.addf %221, %224 : vector<8x128xf32>
    %226 = math.tanh %225 : vector<8x128xf32>
    %227 = arith.index_cast %217 : i32 to index
    %228 = memref.load %arg3[%227] : memref<32xf32, #tpu.memory_space<smem>>
    %229 = vector.broadcast %228 : f32 to vector<8x128xf32>
    %230 = arith.mulf %229, %226 : vector<8x128xf32>
    %231 = arith.addf %201, %230 : vector<8x128xf32>
    %c1_i32_17 = arith.constant 1 : i32
    %232 = arith.addi %217, %c1_i32_17 : i32
    %233 = arith.index_cast %232 : i32 to index
    %234 = memref.load %arg1[%233] : memref<32xf32, #tpu.memory_space<smem>>
    %235 = vector.broadcast %234 : f32 to vector<8x128xf32>
    %236 = arith.mulf %235, %3 : vector<8x128xf32>
    %237 = arith.index_cast %232 : i32 to index
    %238 = memref.load %arg2[%237] : memref<32xf32, #tpu.memory_space<smem>>
    %239 = vector.broadcast %238 : f32 to vector<8x128xf32>
    %240 = arith.addf %236, %239 : vector<8x128xf32>
    %241 = math.tanh %240 : vector<8x128xf32>
    %242 = arith.index_cast %232 : i32 to index
    %243 = memref.load %arg3[%242] : memref<32xf32, #tpu.memory_space<smem>>
    %244 = vector.broadcast %243 : f32 to vector<8x128xf32>
    %245 = arith.mulf %244, %241 : vector<8x128xf32>
    %246 = arith.addf %216, %245 : vector<8x128xf32>
    %c8_i32_18 = arith.constant 8 : i32
    %c2_i32_19 = arith.constant 2 : i32
    %247 = arith.muli %c2_i32_19, %c8_i32_18 : i32
    %248 = arith.index_cast %247 : i32 to index
    %249 = memref.load %arg1[%248] : memref<32xf32, #tpu.memory_space<smem>>
    %250 = vector.broadcast %249 : f32 to vector<8x128xf32>
    %251 = arith.mulf %250, %3 : vector<8x128xf32>
    %252 = arith.index_cast %247 : i32 to index
    %253 = memref.load %arg2[%252] : memref<32xf32, #tpu.memory_space<smem>>
    %254 = vector.broadcast %253 : f32 to vector<8x128xf32>
    %255 = arith.addf %251, %254 : vector<8x128xf32>
    %256 = math.tanh %255 : vector<8x128xf32>
    %257 = arith.index_cast %247 : i32 to index
    %258 = memref.load %arg3[%257] : memref<32xf32, #tpu.memory_space<smem>>
    %259 = vector.broadcast %258 : f32 to vector<8x128xf32>
    %260 = arith.mulf %259, %256 : vector<8x128xf32>
    %261 = arith.addf %231, %260 : vector<8x128xf32>
    %c1_i32_20 = arith.constant 1 : i32
    %262 = arith.addi %247, %c1_i32_20 : i32
    %263 = arith.index_cast %262 : i32 to index
    %264 = memref.load %arg1[%263] : memref<32xf32, #tpu.memory_space<smem>>
    %265 = vector.broadcast %264 : f32 to vector<8x128xf32>
    %266 = arith.mulf %265, %3 : vector<8x128xf32>
    %267 = arith.index_cast %262 : i32 to index
    %268 = memref.load %arg2[%267] : memref<32xf32, #tpu.memory_space<smem>>
    %269 = vector.broadcast %268 : f32 to vector<8x128xf32>
    %270 = arith.addf %266, %269 : vector<8x128xf32>
    %271 = math.tanh %270 : vector<8x128xf32>
    %272 = arith.index_cast %262 : i32 to index
    %273 = memref.load %arg3[%272] : memref<32xf32, #tpu.memory_space<smem>>
    %274 = vector.broadcast %273 : f32 to vector<8x128xf32>
    %275 = arith.mulf %274, %271 : vector<8x128xf32>
    %276 = arith.addf %246, %275 : vector<8x128xf32>
    %c9_i32 = arith.constant 9 : i32
    %c2_i32_21 = arith.constant 2 : i32
    %277 = arith.muli %c2_i32_21, %c9_i32 : i32
    %278 = arith.index_cast %277 : i32 to index
    %279 = memref.load %arg1[%278] : memref<32xf32, #tpu.memory_space<smem>>
    %280 = vector.broadcast %279 : f32 to vector<8x128xf32>
    %281 = arith.mulf %280, %3 : vector<8x128xf32>
    %282 = arith.index_cast %277 : i32 to index
    %283 = memref.load %arg2[%282] : memref<32xf32, #tpu.memory_space<smem>>
    %284 = vector.broadcast %283 : f32 to vector<8x128xf32>
    %285 = arith.addf %281, %284 : vector<8x128xf32>
    %286 = math.tanh %285 : vector<8x128xf32>
    %287 = arith.index_cast %277 : i32 to index
    %288 = memref.load %arg3[%287] : memref<32xf32, #tpu.memory_space<smem>>
    %289 = vector.broadcast %288 : f32 to vector<8x128xf32>
    %290 = arith.mulf %289, %286 : vector<8x128xf32>
    %291 = arith.addf %261, %290 : vector<8x128xf32>
    %c1_i32_22 = arith.constant 1 : i32
    %292 = arith.addi %277, %c1_i32_22 : i32
    %293 = arith.index_cast %292 : i32 to index
    %294 = memref.load %arg1[%293] : memref<32xf32, #tpu.memory_space<smem>>
    %295 = vector.broadcast %294 : f32 to vector<8x128xf32>
    %296 = arith.mulf %295, %3 : vector<8x128xf32>
    %297 = arith.index_cast %292 : i32 to index
    %298 = memref.load %arg2[%297] : memref<32xf32, #tpu.memory_space<smem>>
    %299 = vector.broadcast %298 : f32 to vector<8x128xf32>
    %300 = arith.addf %296, %299 : vector<8x128xf32>
    %301 = math.tanh %300 : vector<8x128xf32>
    %302 = arith.index_cast %292 : i32 to index
    %303 = memref.load %arg3[%302] : memref<32xf32, #tpu.memory_space<smem>>
    %304 = vector.broadcast %303 : f32 to vector<8x128xf32>
    %305 = arith.mulf %304, %301 : vector<8x128xf32>
    %306 = arith.addf %276, %305 : vector<8x128xf32>
    %c10_i32 = arith.constant 10 : i32
    %c2_i32_23 = arith.constant 2 : i32
    %307 = arith.muli %c2_i32_23, %c10_i32 : i32
    %308 = arith.index_cast %307 : i32 to index
    %309 = memref.load %arg1[%308] : memref<32xf32, #tpu.memory_space<smem>>
    %310 = vector.broadcast %309 : f32 to vector<8x128xf32>
    %311 = arith.mulf %310, %3 : vector<8x128xf32>
    %312 = arith.index_cast %307 : i32 to index
    %313 = memref.load %arg2[%312] : memref<32xf32, #tpu.memory_space<smem>>
    %314 = vector.broadcast %313 : f32 to vector<8x128xf32>
    %315 = arith.addf %311, %314 : vector<8x128xf32>
    %316 = math.tanh %315 : vector<8x128xf32>
    %317 = arith.index_cast %307 : i32 to index
    %318 = memref.load %arg3[%317] : memref<32xf32, #tpu.memory_space<smem>>
    %319 = vector.broadcast %318 : f32 to vector<8x128xf32>
    %320 = arith.mulf %319, %316 : vector<8x128xf32>
    %321 = arith.addf %291, %320 : vector<8x128xf32>
    %c1_i32_24 = arith.constant 1 : i32
    %322 = arith.addi %307, %c1_i32_24 : i32
    %323 = arith.index_cast %322 : i32 to index
    %324 = memref.load %arg1[%323] : memref<32xf32, #tpu.memory_space<smem>>
    %325 = vector.broadcast %324 : f32 to vector<8x128xf32>
    %326 = arith.mulf %325, %3 : vector<8x128xf32>
    %327 = arith.index_cast %322 : i32 to index
    %328 = memref.load %arg2[%327] : memref<32xf32, #tpu.memory_space<smem>>
    %329 = vector.broadcast %328 : f32 to vector<8x128xf32>
    %330 = arith.addf %326, %329 : vector<8x128xf32>
    %331 = math.tanh %330 : vector<8x128xf32>
    %332 = arith.index_cast %322 : i32 to index
    %333 = memref.load %arg3[%332] : memref<32xf32, #tpu.memory_space<smem>>
    %334 = vector.broadcast %333 : f32 to vector<8x128xf32>
    %335 = arith.mulf %334, %331 : vector<8x128xf32>
    %336 = arith.addf %306, %335 : vector<8x128xf32>
    %c11_i32 = arith.constant 11 : i32
    %c2_i32_25 = arith.constant 2 : i32
    %337 = arith.muli %c2_i32_25, %c11_i32 : i32
    %338 = arith.index_cast %337 : i32 to index
    %339 = memref.load %arg1[%338] : memref<32xf32, #tpu.memory_space<smem>>
    %340 = vector.broadcast %339 : f32 to vector<8x128xf32>
    %341 = arith.mulf %340, %3 : vector<8x128xf32>
    %342 = arith.index_cast %337 : i32 to index
    %343 = memref.load %arg2[%342] : memref<32xf32, #tpu.memory_space<smem>>
    %344 = vector.broadcast %343 : f32 to vector<8x128xf32>
    %345 = arith.addf %341, %344 : vector<8x128xf32>
    %346 = math.tanh %345 : vector<8x128xf32>
    %347 = arith.index_cast %337 : i32 to index
    %348 = memref.load %arg3[%347] : memref<32xf32, #tpu.memory_space<smem>>
    %349 = vector.broadcast %348 : f32 to vector<8x128xf32>
    %350 = arith.mulf %349, %346 : vector<8x128xf32>
    %351 = arith.addf %321, %350 : vector<8x128xf32>
    %c1_i32_26 = arith.constant 1 : i32
    %352 = arith.addi %337, %c1_i32_26 : i32
    %353 = arith.index_cast %352 : i32 to index
    %354 = memref.load %arg1[%353] : memref<32xf32, #tpu.memory_space<smem>>
    %355 = vector.broadcast %354 : f32 to vector<8x128xf32>
    %356 = arith.mulf %355, %3 : vector<8x128xf32>
    %357 = arith.index_cast %352 : i32 to index
    %358 = memref.load %arg2[%357] : memref<32xf32, #tpu.memory_space<smem>>
    %359 = vector.broadcast %358 : f32 to vector<8x128xf32>
    %360 = arith.addf %356, %359 : vector<8x128xf32>
    %361 = math.tanh %360 : vector<8x128xf32>
    %362 = arith.index_cast %352 : i32 to index
    %363 = memref.load %arg3[%362] : memref<32xf32, #tpu.memory_space<smem>>
    %364 = vector.broadcast %363 : f32 to vector<8x128xf32>
    %365 = arith.mulf %364, %361 : vector<8x128xf32>
    %366 = arith.addf %336, %365 : vector<8x128xf32>
    %c12_i32 = arith.constant 12 : i32
    %c2_i32_27 = arith.constant 2 : i32
    %367 = arith.muli %c2_i32_27, %c12_i32 : i32
    %368 = arith.index_cast %367 : i32 to index
    %369 = memref.load %arg1[%368] : memref<32xf32, #tpu.memory_space<smem>>
    %370 = vector.broadcast %369 : f32 to vector<8x128xf32>
    %371 = arith.mulf %370, %3 : vector<8x128xf32>
    %372 = arith.index_cast %367 : i32 to index
    %373 = memref.load %arg2[%372] : memref<32xf32, #tpu.memory_space<smem>>
    %374 = vector.broadcast %373 : f32 to vector<8x128xf32>
    %375 = arith.addf %371, %374 : vector<8x128xf32>
    %376 = math.tanh %375 : vector<8x128xf32>
    %377 = arith.index_cast %367 : i32 to index
    %378 = memref.load %arg3[%377] : memref<32xf32, #tpu.memory_space<smem>>
    %379 = vector.broadcast %378 : f32 to vector<8x128xf32>
    %380 = arith.mulf %379, %376 : vector<8x128xf32>
    %381 = arith.addf %351, %380 : vector<8x128xf32>
    %c1_i32_28 = arith.constant 1 : i32
    %382 = arith.addi %367, %c1_i32_28 : i32
    %383 = arith.index_cast %382 : i32 to index
    %384 = memref.load %arg1[%383] : memref<32xf32, #tpu.memory_space<smem>>
    %385 = vector.broadcast %384 : f32 to vector<8x128xf32>
    %386 = arith.mulf %385, %3 : vector<8x128xf32>
    %387 = arith.index_cast %382 : i32 to index
    %388 = memref.load %arg2[%387] : memref<32xf32, #tpu.memory_space<smem>>
    %389 = vector.broadcast %388 : f32 to vector<8x128xf32>
    %390 = arith.addf %386, %389 : vector<8x128xf32>
    %391 = math.tanh %390 : vector<8x128xf32>
    %392 = arith.index_cast %382 : i32 to index
    %393 = memref.load %arg3[%392] : memref<32xf32, #tpu.memory_space<smem>>
    %394 = vector.broadcast %393 : f32 to vector<8x128xf32>
    %395 = arith.mulf %394, %391 : vector<8x128xf32>
    %396 = arith.addf %366, %395 : vector<8x128xf32>
    %c13_i32 = arith.constant 13 : i32
    %c2_i32_29 = arith.constant 2 : i32
    %397 = arith.muli %c2_i32_29, %c13_i32 : i32
    %398 = arith.index_cast %397 : i32 to index
    %399 = memref.load %arg1[%398] : memref<32xf32, #tpu.memory_space<smem>>
    %400 = vector.broadcast %399 : f32 to vector<8x128xf32>
    %401 = arith.mulf %400, %3 : vector<8x128xf32>
    %402 = arith.index_cast %397 : i32 to index
    %403 = memref.load %arg2[%402] : memref<32xf32, #tpu.memory_space<smem>>
    %404 = vector.broadcast %403 : f32 to vector<8x128xf32>
    %405 = arith.addf %401, %404 : vector<8x128xf32>
    %406 = math.tanh %405 : vector<8x128xf32>
    %407 = arith.index_cast %397 : i32 to index
    %408 = memref.load %arg3[%407] : memref<32xf32, #tpu.memory_space<smem>>
    %409 = vector.broadcast %408 : f32 to vector<8x128xf32>
    %410 = arith.mulf %409, %406 : vector<8x128xf32>
    %411 = arith.addf %381, %410 : vector<8x128xf32>
    %c1_i32_30 = arith.constant 1 : i32
    %412 = arith.addi %397, %c1_i32_30 : i32
    %413 = arith.index_cast %412 : i32 to index
    %414 = memref.load %arg1[%413] : memref<32xf32, #tpu.memory_space<smem>>
    %415 = vector.broadcast %414 : f32 to vector<8x128xf32>
    %416 = arith.mulf %415, %3 : vector<8x128xf32>
    %417 = arith.index_cast %412 : i32 to index
    %418 = memref.load %arg2[%417] : memref<32xf32, #tpu.memory_space<smem>>
    %419 = vector.broadcast %418 : f32 to vector<8x128xf32>
    %420 = arith.addf %416, %419 : vector<8x128xf32>
    %421 = math.tanh %420 : vector<8x128xf32>
    %422 = arith.index_cast %412 : i32 to index
    %423 = memref.load %arg3[%422] : memref<32xf32, #tpu.memory_space<smem>>
    %424 = vector.broadcast %423 : f32 to vector<8x128xf32>
    %425 = arith.mulf %424, %421 : vector<8x128xf32>
    %426 = arith.addf %396, %425 : vector<8x128xf32>
    %c14_i32 = arith.constant 14 : i32
    %c2_i32_31 = arith.constant 2 : i32
    %427 = arith.muli %c2_i32_31, %c14_i32 : i32
    %428 = arith.index_cast %427 : i32 to index
    %429 = memref.load %arg1[%428] : memref<32xf32, #tpu.memory_space<smem>>
    %430 = vector.broadcast %429 : f32 to vector<8x128xf32>
    %431 = arith.mulf %430, %3 : vector<8x128xf32>
    %432 = arith.index_cast %427 : i32 to index
    %433 = memref.load %arg2[%432] : memref<32xf32, #tpu.memory_space<smem>>
    %434 = vector.broadcast %433 : f32 to vector<8x128xf32>
    %435 = arith.addf %431, %434 : vector<8x128xf32>
    %436 = math.tanh %435 : vector<8x128xf32>
    %437 = arith.index_cast %427 : i32 to index
    %438 = memref.load %arg3[%437] : memref<32xf32, #tpu.memory_space<smem>>
    %439 = vector.broadcast %438 : f32 to vector<8x128xf32>
    %440 = arith.mulf %439, %436 : vector<8x128xf32>
    %441 = arith.addf %411, %440 : vector<8x128xf32>
    %c1_i32_32 = arith.constant 1 : i32
    %442 = arith.addi %427, %c1_i32_32 : i32
    %443 = arith.index_cast %442 : i32 to index
    %444 = memref.load %arg1[%443] : memref<32xf32, #tpu.memory_space<smem>>
    %445 = vector.broadcast %444 : f32 to vector<8x128xf32>
    %446 = arith.mulf %445, %3 : vector<8x128xf32>
    %447 = arith.index_cast %442 : i32 to index
    %448 = memref.load %arg2[%447] : memref<32xf32, #tpu.memory_space<smem>>
    %449 = vector.broadcast %448 : f32 to vector<8x128xf32>
    %450 = arith.addf %446, %449 : vector<8x128xf32>
    %451 = math.tanh %450 : vector<8x128xf32>
    %452 = arith.index_cast %442 : i32 to index
    %453 = memref.load %arg3[%452] : memref<32xf32, #tpu.memory_space<smem>>
    %454 = vector.broadcast %453 : f32 to vector<8x128xf32>
    %455 = arith.mulf %454, %451 : vector<8x128xf32>
    %456 = arith.addf %426, %455 : vector<8x128xf32>
    %c15_i32 = arith.constant 15 : i32
    %c2_i32_33 = arith.constant 2 : i32
    %457 = arith.muli %c2_i32_33, %c15_i32 : i32
    %458 = arith.index_cast %457 : i32 to index
    %459 = memref.load %arg1[%458] : memref<32xf32, #tpu.memory_space<smem>>
    %460 = vector.broadcast %459 : f32 to vector<8x128xf32>
    %461 = arith.mulf %460, %3 : vector<8x128xf32>
    %462 = arith.index_cast %457 : i32 to index
    %463 = memref.load %arg2[%462] : memref<32xf32, #tpu.memory_space<smem>>
    %464 = vector.broadcast %463 : f32 to vector<8x128xf32>
    %465 = arith.addf %461, %464 : vector<8x128xf32>
    %466 = math.tanh %465 : vector<8x128xf32>
    %467 = arith.index_cast %457 : i32 to index
    %468 = memref.load %arg3[%467] : memref<32xf32, #tpu.memory_space<smem>>
    %469 = vector.broadcast %468 : f32 to vector<8x128xf32>
    %470 = arith.mulf %469, %466 : vector<8x128xf32>
    %471 = arith.addf %441, %470 : vector<8x128xf32>
    %c1_i32_34 = arith.constant 1 : i32
    %472 = arith.addi %457, %c1_i32_34 : i32
    %473 = arith.index_cast %472 : i32 to index
    %474 = memref.load %arg1[%473] : memref<32xf32, #tpu.memory_space<smem>>
    %475 = vector.broadcast %474 : f32 to vector<8x128xf32>
    %476 = arith.mulf %475, %3 : vector<8x128xf32>
    %477 = arith.index_cast %472 : i32 to index
    %478 = memref.load %arg2[%477] : memref<32xf32, #tpu.memory_space<smem>>
    %479 = vector.broadcast %478 : f32 to vector<8x128xf32>
    %480 = arith.addf %476, %479 : vector<8x128xf32>
    %481 = math.tanh %480 : vector<8x128xf32>
    %482 = arith.index_cast %472 : i32 to index
    %483 = memref.load %arg3[%482] : memref<32xf32, #tpu.memory_space<smem>>
    %484 = vector.broadcast %483 : f32 to vector<8x128xf32>
    %485 = arith.mulf %484, %481 : vector<8x128xf32>
    %486 = arith.addf %456, %485 : vector<8x128xf32>
    %c16_i32 = arith.constant 16 : i32
    %487 = arith.addf %471, %486 : vector<8x128xf32>
    %488 = arith.index_cast %1 : i32 to index
    %c0_35 = arith.constant 0 : index
    %489 = vector.load %arg6[%488, %c0_35] : memref<8x128xf32, #tpu.memory_space<vmem>>, vector<8x128xf32>
    tpu.vector_store %arg6[%488, %c0_35], %487 {strides = array<i32>} : memref<8x128xf32, #tpu.memory_space<vmem>>, vector<8x128xf32>,
    %c1_i32_36 = arith.constant 1 : i32
    return
  }
  func.func @transform_0(%arg0: i32) -> i32 {
    %c0_i32 = arith.constant 0 : i32
    %c0_i32_0 = arith.constant 0 : i32
    return %c0_i32 : i32
  }
  func.func @transform_1(%arg0: i32) -> i32 {
    %c0_i32 = arith.constant 0 : i32
    %c0_i32_0 = arith.constant 0 : i32
    return %c0_i32 : i32
  }
  func.func @transform_2(%arg0: i32) -> i32 {
    %c0_i32 = arith.constant 0 : i32
    %c0_i32_0 = arith.constant 0 : i32
    return %c0_i32 : i32
  }
  func.func @transform_3(%arg0: i32) -> i32 {
    %c0_i32 = arith.constant 0 : i32
    %c0_i32_0 = arith.constant 0 : i32
    return %c0_i32 : i32
  }
  func.func @transform_4(%arg0: i32) -> (i32, i32) {
    %c0_i32 = arith.constant 0 : i32
    %c0_i32_0 = arith.constant 0 : i32
    return %arg0, %c0_i32 : i32, i32
  }
  func.func @transform_5(%arg0: i32) -> (i32, i32) {
    %c0_i32 = arith.constant 0 : i32
    %c0_i32_0 = arith.constant 0 : i32
    return %arg0, %c0_i32 : i32, i32
  }
}

</mosaic_0001>

<llo_original>
// kernel: tpu_custom_call.1
$region0: #{tpu_custom_call.1}
  #allocation0 [shape = 'u32[]', space=smem, size = 0x4, offset = 0x4, fixed_abs, tag = 'smem constant byte address 0x4 - core index']
  #allocation1 [shape = 'u32[72,128]{1,0:T(1,128)}', space=vmem, size = 0x9000, scoped, tag = 'internal scratch']
  #allocation2 [shape = 'f32[1]{0:T(128)S(6)}', space=smem, size = 0x200, scoped, tag = 'scoped memory for tpu_custom_call.1']
  %s0 = inlined_call_operand.vmem [shape: f32[32], index: 0, kind: input, shape index: {}]
  %s1 = inlined_call_operand.vmem [shape: f32[32], index: 1, kind: input, shape index: {}]
  %s2 = inlined_call_operand.vmem [shape: f32[32], index: 2, kind: input, shape index: {}]
  %s3 = inlined_call_operand.<no memory space> [shape: f32[1], index: 3, kind: input, shape index: {}]
  %s4 = inlined_call_operand.hbm [shape: f32[8,128], index: 4, kind: input, shape index: {}]
  %s5 = inlined_call_operand.hbm [shape: f32[8,128], index: 5, kind: output, shape index: {}]
  %s6 = sld [smem:[#allocation0]]
  $region46: #{tpu_custom_call.1} parent=0
    _
  %s8 = ssub.s32 1, %s6
  %s9 = scalar_select 0, %s8, %s6
  %10 = sst [smem:[#allocation2]] %s3
  $region1: #{tpu_custom_call.1} parent=0
    #allocation3 [shape = 'u8[512]{0}', space=smem, size = 0x200, scoped, tag = 'input window, operand 0, single buffered']
    #allocation4 [shape = 's32[1]{0}', space=sflag, size = 0x4, scoped, tag = 'scoped memory for tpu_custom_call.1']
    #allocation5 [shape = 's32[1]{0}', space=sflag, size = 0x4, scoped, tag = 'scoped memory for tpu_custom_call.1']
    #allocation6 [shape = 's32[1]{0}', space=sflag, size = 0x4, scoped, tag = 'scoped memory for tpu_custom_call.1']
    #allocation7 [shape = 'u8[512]{0}', space=smem, size = 0x200, scoped, tag = 'input window, operand 1, single buffered']
    #allocation8 [shape = 's32[1]{0}', space=sflag, size = 0x4, scoped, tag = 'scoped memory for tpu_custom_call.1']
    #allocation9 [shape = 'u8[512]{0}', space=smem, size = 0x200, scoped, tag = 'input window, operand 2, single buffered']
    #allocation10 [shape = 'u8[4096]{0}', space=vmem, size = 0x1000, scoped, tag = 'input window, operand 4, single buffered']
    #allocation11 [shape = 'u8[4096]{0}', space=vmem, size = 0x1000, scoped, tag = 'output window, operand 0, single buffered']
    %11 = vsyncpa [#allocation6], 0
    %12 = vsyncpa [#allocation8], 0
    %13 = vsyncpa [#allocation4], 0
    %14 = vsyncpa [#allocation5], 0
    // Predicated region
    $region2: #{tpu_custom_call.1} parent=1 // pred_check
      _
    $region3: #{tpu_custom_call.1} parent=1 // pred_check_branch
      %16 = sbr.rel (0) target = $region5
    $region4: #{tpu_custom_call.1} parent=1 // pred_region
      %18 = vsyncadd [#allocation6], 0
      %s20 = sshll.u32 %s0, 4
      %s21 = int_to_ptr.vmem [resolvable:$true] %s20
      %23 = dma.vmem_to_smem %s21, 16, [#allocation3], [#allocation6]
    $region5: #{tpu_custom_call.1} parent=1 // pred_fallthru
      _
    // Predicated region
    $region6: #{tpu_custom_call.1} parent=1 // pred_check
      _
    $region7: #{tpu_custom_call.1} parent=1 // pred_check_branch
      %25 = sbr.rel (0) target = $region9
    $region8: #{tpu_custom_call.1} parent=1 // pred_region
      %27 = vsyncadd [#allocation8], 0
      %s29 = sshll.u32 %s1, 4
      %s30 = int_to_ptr.vmem [resolvable:$true] %s29
      %32 = dma.vmem_to_smem %s30, 16, [#allocation7], [#allocation8]
    $region9: #{tpu_custom_call.1} parent=1 // pred_fallthru
      _
    // Predicated region
    $region10: #{tpu_custom_call.1} parent=1 // pred_check
      _
    $region11: #{tpu_custom_call.1} parent=1 // pred_check_branch
      %34 = sbr.rel (0) target = $region13
    $region12: #{tpu_custom_call.1} parent=1 // pred_region
      %36 = vsyncadd [#allocation8], 0
      %s38 = sshll.u32 %s2, 4
      %s39 = int_to_ptr.vmem [resolvable:$true] %s38
      %41 = dma.vmem_to_smem %s39, 16, [#allocation9], [#allocation8]
    $region13: #{tpu_custom_call.1} parent=1 // pred_fallthru
      _
    // Predicated region
    $region14: #{tpu_custom_call.1} parent=1 // pred_check
      _
    $region15: #{tpu_custom_call.1} parent=1 // pred_check_branch
      %43 = sbr.rel (0) target = $region17
    $region16: #{tpu_custom_call.1} parent=1 // pred_region
      _
    $region17: #{tpu_custom_call.1} parent=1 // pred_fallthru
      _
    // Predicated region
    $region18: #{tpu_custom_call.1} parent=1 // pred_check
      _
    $region19: #{tpu_custom_call.1} parent=1 // pred_check_branch
      %45 = sbr.rel (0) target = $region21
    $region20: #{tpu_custom_call.1} parent=1 // pred_region
      %47 = vsyncadd [#allocation4], 0
      %s49 = sshll.u32 %s4, 4
      %s50 = int_to_ptr.hbm [resolvable:$true] %s49
      %s51 = sshll.u32 [#allocation10], 4
      %s52 = int_to_ptr.vmem [resolvable:$true] %s51
      %54 = dma.hbm_to_vmem [thread:$0]  %s50, 128, %s52, [#allocation4]
    $region21: #{tpu_custom_call.1} parent=1 // pred_fallthru
      _
    // Predicated region
    $region22: #{tpu_custom_call.1} parent=1 // pred_check
      _
    $region23: #{tpu_custom_call.1} parent=1 // pred_check_branch
      %56 = sbr.rel (0) target = $region25
    $region24: #{tpu_custom_call.1} parent=1 // pred_region
      %58 = dma.done [#allocation6], 16
    $region25: #{tpu_custom_call.1} parent=1 // pred_fallthru
      _
    // Predicated region
    $region26: #{tpu_custom_call.1} parent=1 // pred_check
      _
    $region27: #{tpu_custom_call.1} parent=1 // pred_check_branch
      %60 = sbr.rel (0) target = $region29
    $region28: #{tpu_custom_call.1} parent=1 // pred_region
      %62 = dma.done [#allocation8], 16
    $region29: #{tpu_custom_call.1} parent=1 // pred_fallthru
      _
    // Predicated region
    $region30: #{tpu_custom_call.1} parent=1 // pred_check
      _
    $region31: #{tpu_custom_call.1} parent=1 // pred_check_branch
      %64 = sbr.rel (0) target = $region33
    $region32: #{tpu_custom_call.1} parent=1 // pred_region
      %66 = dma.done [#allocation8], 16
    $region33: #{tpu_custom_call.1} parent=1 // pred_fallthru
      _
    // Predicated region
    $region34: #{tpu_custom_call.1} parent=1 // pred_check
      _
    $region35: #{tpu_custom_call.1} parent=1 // pred_check_branch
      %68 = sbr.rel (0) target = $region37
    $region36: #{tpu_custom_call.1} parent=1 // pred_region
      %70 = dma.done [#allocation4], 128
    $region37: #{tpu_custom_call.1} parent=1 // pred_fallthru
      _
    %71 = sfence
    %v72 = vld [vmem:[#allocation10] sm:$0xff]
    %s73 = sld [smem:[#allocation2]]
    %v74 = vstv %s73
    %s75 = sld [smem:[#allocation3]]
    %v76 = vstv %s75
    %v77 = vmul.f32 %v76, %v72
    %s78 = sld [smem:[#allocation7]]
    %v79 = vstv %s78
    %v80 = vadd.f32 %v77, %v79
    %v81 = vtanh.pop %v80
    %s82 = sld [smem:[#allocation9]]
    %v83 = vstv %s82
    %v84 = vmul.f32 %v83, %v81
    %v85 = vadd.f32 %v74, %v84
    %s86 = sld [smem:[#allocation3 + $0x1]]
    %v87 = vstv %s86
    %v88 = vmul.f32 %v87, %v72
    %s89 = sld [smem:[#allocation7 + $0x1]]
    %v90 = vstv %s89
    %v91 = vadd.f32 %v88, %v90
    %v92 = vtanh.pop %v91
    %s93 = sld [smem:[#allocation9 + $0x1]]
    %v94 = vstv %s93
    %v95 = vmul.f32 %v94, %v92
    %v96 = vadd.f32 %v95, 0.0
    %s97 = sld [smem:[#allocation3 + $0x2]]
    %v98 = vstv %s97
    %v99 = vmul.f32 %v98, %v72
    %s100 = sld [smem:[#allocation7 + $0x2]]
    %v101 = vstv %s100
    %v102 = vadd.f32 %v99, %v101
    %v103 = vtanh.pop %v102
    %s104 = sld [smem:[#allocation9 + $0x2]]
    %v105 = vstv %s104
    %v106 = vmul.f32 %v105, %v103
    %v107 = vadd.f32 %v85, %v106
    %s108 = sld [smem:[#allocation3 + $0x3]]
    %v109 = vstv %s108
    %v110 = vmul.f32 %v109, %v72
    %s111 = sld [smem:[#allocation7 + $0x3]]
    %v112 = vstv %s111
    %v113 = vadd.f32 %v110, %v112
    %v114 = vtanh.pop %v113
    %s115 = sld [smem:[#allocation9 + $0x3]]
    %v116 = vstv %s115
    %v117 = vmul.f32 %v116, %v114
    %v118 = vadd.f32 %v96, %v117
    %s119 = sld [smem:[#allocation3 + $0x4]]
    %v120 = vstv %s119
    %v121 = vmul.f32 %v120, %v72
    %s122 = sld [smem:[#allocation7 + $0x4]]
    %v123 = vstv %s122
    %v124 = vadd.f32 %v121, %v123
    %v125 = vtanh.pop %v124
    %s126 = sld [smem:[#allocation9 + $0x4]]
    %v127 = vstv %s126
    %v128 = vmul.f32 %v127, %v125
    %v129 = vadd.f32 %v107, %v128
    %s130 = sld [smem:[#allocation3 + $0x5]]
    %v131 = vstv %s130
    %v132 = vmul.f32 %v131, %v72
    %s133 = sld [smem:[#allocation7 + $0x5]]
    %v134 = vstv %s133
    %v135 = vadd.f32 %v132, %v134
    %v136 = vtanh.pop %v135
    %s137 = sld [smem:[#allocation9 + $0x5]]
    %v138 = vstv %s137
    %v139 = vmul.f32 %v138, %v136
    %v140 = vadd.f32 %v118, %v139
    %s141 = sld [smem:[#allocation3 + $0x6]]
    %v142 = vstv %s141
    %v143 = vmul.f32 %v142, %v72
    %s144 = sld [smem:[#allocation7 + $0x6]]
    %v145 = vstv %s144
    %v146 = vadd.f32 %v143, %v145
    %v147 = vtanh.pop %v146
    %s148 = sld [smem:[#allocation9 + $0x6]]
    %v149 = vstv %s148
    %v150 = vmul.f32 %v149, %v147
    %v151 = vadd.f32 %v129, %v150
    %s152 = sld [smem:[#allocation3 + $0x7]]
    %v153 = vstv %s152
    %v154 = vmul.f32 %v153, %v72
    %s155 = sld [smem:[#allocation7 + $0x7]]
    %v156 = vstv %s155
    %v157 = vadd.f32 %v154, %v156
    %v158 = vtanh.pop %v157
    %s159 = sld [smem:[#allocation9 + $0x7]]
    %v160 = vstv %s159
    %v161 = vmul.f32 %v160, %v158
    %v162 = vadd.f32 %v140, %v161
    %s163 = sld [smem:[#allocation3 + $0x8]]
    %v164 = vstv %s163
    %v165 = vmul.f32 %v164, %v72
    %s166 = sld [smem:[#allocation7 + $0x8]]
    %v167 = vstv %s166
    %v168 = vadd.f32 %v165, %v167
    %v169 = vtanh.pop %v168
    %s170 = sld [smem:[#allocation9 + $0x8]]
    %v171 = vstv %s170
    %v172 = vmul.f32 %v171, %v169
    %v173 = vadd.f32 %v151, %v172
    %s174 = sld [smem:[#allocation3 + $0x9]]
    %v175 = vstv %s174
    %v176 = vmul.f32 %v175, %v72
    %s177 = sld [smem:[#allocation7 + $0x9]]
    %v178 = vstv %s177
    %v179 = vadd.f32 %v176, %v178
    %v180 = vtanh.pop %v179
    %s181 = sld [smem:[#allocation9 + $0x9]]
    %v182 = vstv %s181
    %v183 = vmul.f32 %v182, %v180
    %v184 = vadd.f32 %v162, %v183
    %s185 = sld [smem:[#allocation3 + $0xa]]
    %v186 = vstv %s185
    %v187 = vmul.f32 %v186, %v72
    %s188 = sld [smem:[#allocation7 + $0xa]]
    %v189 = vstv %s188
    %v190 = vadd.f32 %v187, %v189
    %v191 = vtanh.pop %v190
    %s192 = sld [smem:[#allocation9 + $0xa]]
    %v193 = vstv %s192
    %v194 = vmul.f32 %v193, %v191
    %v195 = vadd.f32 %v173, %v194
    %s196 = sld [smem:[#allocation3 + $0xb]]
    %v197 = vstv %s196
    %v198 = vmul.f32 %v197, %v72
    %s199 = sld [smem:[#allocation7 + $0xb]]
    %v200 = vstv %s199
    %v201 = vadd.f32 %v198, %v200
    %v202 = vtanh.pop %v201
    %s203 = sld [smem:[#allocation9 + $0xb]]
    %v204 = vstv %s203
    %v205 = vmul.f32 %v204, %v202
    %v206 = vadd.f32 %v184, %v205
    %s207 = sld [smem:[#allocation3 + $0xc]]
    %v208 = vstv %s207
    %v209 = vmul.f32 %v208, %v72
    %s210 = sld [smem:[#allocation7 + $0xc]]
    %v211 = vstv %s210
    %v212 = vadd.f32 %v209, %v211
    %v213 = vtanh.pop %v212
    %s214 = sld [smem:[#allocation9 + $0xc]]
    %v215 = vstv %s214
    %v216 = vmul.f32 %v215, %v213
    %v217 = vadd.f32 %v195, %v216
    %s218 = sld [smem:[#allocation3 + $0xd]]
    %v219 = vstv %s218
    %v220 = vmul.f32 %v219, %v72
    %s221 = sld [smem:[#allocation7 + $0xd]]
    %v222 = vstv %s221
    %v223 = vadd.f32 %v220, %v222
    %v224 = vtanh.pop %v223
    %s225 = sld [smem:[#allocation9 + $0xd]]
    %v226 = vstv %s225
    %v227 = vmul.f32 %v226, %v224
    %v228 = vadd.f32 %v206, %v227
    %s229 = sld [smem:[#allocation3 + $0xe]]
    %v230 = vstv %s229
    %v231 = vmul.f32 %v230, %v72
    %s232 = sld [smem:[#allocation7 + $0xe]]
    %v233 = vstv %s232
    %v234 = vadd.f32 %v231, %v233
    %v235 = vtanh.pop %v234
    %s236 = sld [smem:[#allocation9 + $0xe]]
    %v237 = vstv %s236
    %v238 = vmul.f32 %v237, %v235
    %v239 = vadd.f32 %v217, %v238
    %s240 = sld [smem:[#allocation3 + $0xf]]
    %v241 = vstv %s240
    %v242 = vmul.f32 %v241, %v72
    %s243 = sld [smem:[#allocation7 + $0xf]]
    %v244 = vstv %s243
    %v245 = vadd.f32 %v242, %v244
    %v246 = vtanh.pop %v245
    %s247 = sld [smem:[#allocation9 + $0xf]]
    %v248 = vstv %s247
    %v249 = vmul.f32 %v248, %v246
    %v250 = vadd.f32 %v228, %v249
    %s251 = sld [smem:[#allocation3 + $0x10]]
    %v252 = vstv %s251
    %v253 = vmul.f32 %v252, %v72
    %s254 = sld [smem:[#allocation7 + $0x10]]
    %v255 = vstv %s254
    %v256 = vadd.f32 %v253, %v255
    %v257 = vtanh.pop %v256
    %s258 = sld [smem:[#allocation9 + $0x10]]
    %v259 = vstv %s258
    %v260 = vmul.f32 %v259, %v257
    %v261 = vadd.f32 %v239, %v260
    %s262 = sld [smem:[#allocation3 + $0x11]]
    %v263 = vstv %s262
    %v264 = vmul.f32 %v263, %v72
    %s265 = sld [smem:[#allocation7 + $0x11]]
    %v266 = vstv %s265
    %v267 = vadd.f32 %v264, %v266
    %v268 = vtanh.pop %v267
    %s269 = sld [smem:[#allocation9 + $0x11]]
    %v270 = vstv %s269
    %v271 = vmul.f32 %v270, %v268
    %v272 = vadd.f32 %v250, %v271
    %s273 = sld [smem:[#allocation3 + $0x12]]
    %v274 = vstv %s273
    %v275 = vmul.f32 %v274, %v72
    %s276 = sld [smem:[#allocation7 + $0x12]]
    %v277 = vstv %s276
    %v278 = vadd.f32 %v275, %v277
    %v279 = vtanh.pop %v278
    %s280 = sld [smem:[#allocation9 + $0x12]]
    %v281 = vstv %s280
    %v282 = vmul.f32 %v281, %v279
    %v283 = vadd.f32 %v261, %v282
    %s284 = sld [smem:[#allocation3 + $0x13]]
    %v285 = vstv %s284
    %v286 = vmul.f32 %v285, %v72
    %s287 = sld [smem:[#allocation7 + $0x13]]
    %v288 = vstv %s287
    %v289 = vadd.f32 %v286, %v288
    %v290 = vtanh.pop %v289
    %s291 = sld [smem:[#allocation9 + $0x13]]
    %v292 = vstv %s291
    %v293 = vmul.f32 %v292, %v290
    %v294 = vadd.f32 %v272, %v293
    %s295 = sld [smem:[#allocation3 + $0x14]]
    %v296 = vstv %s295
    %v297 = vmul.f32 %v296, %v72
    %s298 = sld [smem:[#allocation7 + $0x14]]
    %v299 = vstv %s298
    %v300 = vadd.f32 %v297, %v299
    %v301 = vtanh.pop %v300
    %s302 = sld [smem:[#allocation9 + $0x14]]
    %v303 = vstv %s302
    %v304 = vmul.f32 %v303, %v301
    %v305 = vadd.f32 %v283, %v304
    %s306 = sld [smem:[#allocation3 + $0x15]]
    %v307 = vstv %s306
    %v308 = vmul.f32 %v307, %v72
    %s309 = sld [smem:[#allocation7 + $0x15]]
    %v310 = vstv %s309
    %v311 = vadd.f32 %v308, %v310
    %v312 = vtanh.pop %v311
    %s313 = sld [smem:[#allocation9 + $0x15]]
    %v314 = vstv %s313
    %v315 = vmul.f32 %v314, %v312
    %v316 = vadd.f32 %v294, %v315
    %s317 = sld [smem:[#allocation3 + $0x16]]
    %v318 = vstv %s317
    %v319 = vmul.f32 %v318, %v72
    %s320 = sld [smem:[#allocation7 + $0x16]]
    %v321 = vstv %s320
    %v322 = vadd.f32 %v319, %v321
    %v323 = vtanh.pop %v322
    %s324 = sld [smem:[#allocation9 + $0x16]]
    %v325 = vstv %s324
    %v326 = vmul.f32 %v325, %v323
    %v327 = vadd.f32 %v305, %v326
    %s328 = sld [smem:[#allocation3 + $0x17]]
    %v329 = vstv %s328
    %v330 = vmul.f32 %v329, %v72
    %s331 = sld [smem:[#allocation7 + $0x17]]
    %v332 = vstv %s331
    %v333 = vadd.f32 %v330, %v332
    %v334 = vtanh.pop %v333
    %s335 = sld [smem:[#allocation9 + $0x17]]
    %v336 = vstv %s335
    %v337 = vmul.f32 %v336, %v334
    %v338 = vadd.f32 %v316, %v337
    %s339 = sld [smem:[#allocation3 + $0x18]]
    %v340 = vstv %s339
    %v341 = vmul.f32 %v340, %v72
    %s342 = sld [smem:[#allocation7 + $0x18]]
    %v343 = vstv %s342
    %v344 = vadd.f32 %v341, %v343
    %v345 = vtanh.pop %v344
    %s346 = sld [smem:[#allocation9 + $0x18]]
    %v347 = vstv %s346
    %v348 = vmul.f32 %v347, %v345
    %v349 = vadd.f32 %v327, %v348
    %s350 = sld [smem:[#allocation3 + $0x19]]
    %v351 = vstv %s350
    %v352 = vmul.f32 %v351, %v72
    %s353 = sld [smem:[#allocation7 + $0x19]]
    %v354 = vstv %s353
    %v355 = vadd.f32 %v352, %v354
    %v356 = vtanh.pop %v355
    %s357 = sld [smem:[#allocation9 + $0x19]]
    %v358 = vstv %s357
    %v359 = vmul.f32 %v358, %v356
    %v360 = vadd.f32 %v338, %v359
    %s361 = sld [smem:[#allocation3 + $0x1a]]
    %v362 = vstv %s361
    %v363 = vmul.f32 %v362, %v72
    %s364 = sld [smem:[#allocation7 + $0x1a]]
    %v365 = vstv %s364
    %v366 = vadd.f32 %v363, %v365
    %v367 = vtanh.pop %v366
    %s368 = sld [smem:[#allocation9 + $0x1a]]
    %v369 = vstv %s368
    %v370 = vmul.f32 %v369, %v367
    %v371 = vadd.f32 %v349, %v370
    %s372 = sld [smem:[#allocation3 + $0x1b]]
    %v373 = vstv %s372
    %v374 = vmul.f32 %v373, %v72
    %s375 = sld [smem:[#allocation7 + $0x1b]]
    %v376 = vstv %s375
    %v377 = vadd.f32 %v374, %v376
    %v378 = vtanh.pop %v377
    %s379 = sld [smem:[#allocation9 + $0x1b]]
    %v380 = vstv %s379
    %v381 = vmul.f32 %v380, %v378
    %v382 = vadd.f32 %v360, %v381
    %s383 = sld [smem:[#allocation3 + $0x1c]]
    %v384 = vstv %s383
    %v385 = vmul.f32 %v384, %v72
    %s386 = sld [smem:[#allocation7 + $0x1c]]
    %v387 = vstv %s386
    %v388 = vadd.f32 %v385, %v387
    %v389 = vtanh.pop %v388
    %s390 = sld [smem:[#allocation9 + $0x1c]]
    %v391 = vstv %s390
    %v392 = vmul.f32 %v391, %v389
    %v393 = vadd.f32 %v371, %v392
    %s394 = sld [smem:[#allocation3 + $0x1d]]
    %v395 = vstv %s394
    %v396 = vmul.f32 %v395, %v72
    %s397 = sld [smem:[#allocation7 + $0x1d]]
    %v398 = vstv %s397
    %v399 = vadd.f32 %v396, %v398
    %v400 = vtanh.pop %v399
    %s401 = sld [smem:[#allocation9 + $0x1d]]
    %v402 = vstv %s401
    %v403 = vmul.f32 %v402, %v400
    %v404 = vadd.f32 %v382, %v403
    %s405 = sld [smem:[#allocation3 + $0x1e]]
    %v406 = vstv %s405
    %v407 = vmul.f32 %v406, %v72
    %s408 = sld [smem:[#allocation7 + $0x1e]]
    %v409 = vstv %s408
    %v410 = vadd.f32 %v407, %v409
    %v411 = vtanh.pop %v410
    %s412 = sld [smem:[#allocation9 + $0x1e]]
    %v413 = vstv %s412
    %v414 = vmul.f32 %v413, %v411
    %v415 = vadd.f32 %v393, %v414
    %s416 = sld [smem:[#allocation3 + $0x1f]]
    %v417 = vstv %s416
    %v418 = vmul.f32 %v417, %v72
    %s419 = sld [smem:[#allocation7 + $0x1f]]
    %v420 = vstv %s419
    %v421 = vadd.f32 %v418, %v420
    %v422 = vtanh.pop %v421
    %s423 = sld [smem:[#allocation9 + $0x1f]]
    %v424 = vstv %s423
    %v425 = vmul.f32 %v424, %v422
    %v426 = vadd.f32 %v404, %v425
    %v427 = vadd.f32 %v415, %v426
    %428 = vst [vmem:[#allocation11] sm:$0xff] %v427
    // Predicated region
    $region38: #{tpu_custom_call.1} parent=1 // pred_check
      _
    $region39: #{tpu_custom_call.1} parent=1 // pred_check_branch
      %430 = sbr.rel (0) target = $region41
    $region40: #{tpu_custom_call.1} parent=1 // pred_region
      %432 = vsyncadd [#allocation5], 0
      %s434 = sshll.u32 [#allocation11], 4
      %s435 = int_to_ptr.vmem [resolvable:$true] %s434
      %s436 = sshll.u32 %s5, 4
      %s437 = int_to_ptr.hbm [resolvable:$true] %s436
      %439 = dma.vmem_to_hbm [thread:$0]  %s435, 128, %s437, [#allocation5]
    $region41: #{tpu_custom_call.1} parent=1 // pred_fallthru
      _
    // Predicated region
    $region42: #{tpu_custom_call.1} parent=1 // pred_check
      _
    $region43: #{tpu_custom_call.1} parent=1 // pred_check_branch
      %441 = sbr.rel (0) target = $region45
    $region44: #{tpu_custom_call.1} parent=1 // pred_region
      %443 = dma.done [#allocation5], 128
    $region45: #{tpu_custom_call.1} parent=1 // pred_fallthru
      _
    %444 = vsyncpa [#allocation4], 1
    %445 = vsyncpa [#allocation5], 1
    %446 = vsyncpa [#allocation6], 1
    %447 = vsyncpa [#allocation8], 1

</llo_original>
